<compile_context>
chip_gen: v7x
topology: tpu7x:2x2x1
jax: 0.10.0
libtpu: 0.0.40
codegen_flags: <defaults>
</compile_context>

<pallas_src>
import jax
import jax.numpy as jnp
import numpy as np
from jax.experimental import pallas as pl
from jax.experimental.pallas import tpu as pltpu


def _round_up(v, m):
    return (v + m - 1) // m * m


def combined_kernel(x_ref, dft_ref, w_ref, be_ref, wm_ref, wr_ref, bm_ref,
                    out_ref, hf_acc, lf_acc, emb_acc, num_acc, hh_acc, ll_acc):
    """One (batch i, frequency j, time t) grid step.  Batch lives on lanes everywhere."""
    j = pl.program_id(1)
    t = pl.program_id(2)
    nj = pl.num_programs(1)
    nt = pl.num_programs(2)

    @pl.when((j == 0) & (t == 0))
    def _init_batch_tile():
        num_acc[...] = jnp.zeros_like(num_acc)
        hh_acc[...] = jnp.zeros_like(hh_acc)
        ll_acc[...] = jnp.zeros_like(ll_acc)
        emb_acc[...] = jnp.zeros_like(emb_acc)

    @pl.when(t == 0)
    def _init_freq_tile():
        hf_acc[...] = jnp.zeros_like(hf_acc)
        lf_acc[...] = jnp.zeros_like(lf_acc)

    x0 = x_ref[0]                      # [TT, TB]  channel 0 ("H"), 8-aligned view
    x1 = x_ref[1]                      # [TT, TB]  channel 1 ("L")
    d = dft_ref[...]                   # [WB, TT]  fused [cos; sin] operator rows

    # rfft-as-matmul, accumulated over time tiles (bf16 operands, f32 accumulation).
    # The Im sign of the sin rows is dropped: it cancels in Re(H conj L), |H|^2, |L|^2,
    # and zero-pad rows/cols contribute nothing.
    hf_acc[...] += jnp.dot(d, x0, preferred_element_type=jnp.float32)
    lf_acc[...] += jnp.dot(d, x1, preferred_element_type=jnp.float32)

    # Embedder stand-in Linear(C*T -> E) partials; done once per batch tile (freq tile 0).
    @pl.when(j == 0)
    def _embed():
        emb_acc[...] += (jnp.dot(w_ref[0], x0, preferred_element_type=jnp.float32)
                         + jnp.dot(w_ref[1], x1, preferred_element_type=jnp.float32))

    @pl.when(t == nt - 1)
    def _reduce_freq_tile():
        hf = hf_acc[...]
        lf = lf_acc[...]
        num_acc[...] += jnp.sum(hf * lf, axis=0, keepdims=True)   # Re sum_f H conj(L)
        hh_acc[...] += jnp.sum(hf * hf, axis=0, keepdims=True)    # |H|^2
        ll_acc[...] += jnp.sum(lf * lf, axis=0, keepdims=True)    # |L|^2

        @pl.when(j == nj - 1)
        def _finalize():
            # embedder: bias + ReLU, then the N=1 metric head as VPU mul + sublane reduce
            # (keeps the tiny matvec off the MXU).
            emb = jnp.maximum(emb_acc[...] + be_ref[...], 0.0)            # [E, TB]
            score = jnp.sum(emb * wm_ref[...], axis=0, keepdims=True)     # [1, TB]
            # rho = Re(num) / (|H| |L| + eps)  -- eps placement matches the reference.
            denom = jnp.sqrt(hh_acc[...] * ll_acc[...]) + 1e-8
            out_ref[...] = score + (num_acc[...] / denom) * wr_ref[0] + bm_ref[0]


def _choose_config(B, C, T, E, F, xbytes):
    """Generation-aware tile selection (VMEM-budget driven)."""
    try:
        vmem_cap = int(pltpu.get_tpu_info().vmem_capacity_bytes)
    except Exception:
        vmem_cap = 64 << 20                                  # conservative (v7x-sized)
    small_vmem = vmem_cap <= (80 << 20)                      # v7x-class TensorCore
    vmem_request_cap = (56 << 20) if small_vmem else (100 << 20)
    budget = int(vmem_request_cap * 0.85)

    E_pad = _round_up(E, 8)
    T8 = _round_up(T, 8)
    two_f = 2 * F

    # ---- batch (lane) tile candidates, largest first ----
    if B <= 32:
        tb_candidates = [_round_up(B, 8)]                    # single full-batch block
    elif small_vmem and B > 128:
        tb_candidates = [128]                                # >=2 tiles -> both v7x TCs busy
    elif B > 256:
        tb_candidates = [512, 256, 128]
    else:
        tb_candidates = [256, 128] if B > 128 else [128]     # lane-dense padding

    wb_candidates = [None, 2048, 1024, 512, 256, 128, 64, 32, 16, 8]   # None -> full 2F
    tt_candidates = [None, 2048, 1024, 512, 256, 128]                  # None -> full T

    def lane(n):
        return _round_up(max(int(n), 1), 128)

    def sub(n):
        return _round_up(max(int(n), 1), 8)

    def need_bytes(tb, tt, wb):
        x_blk = C * sub(tt) * lane(tb) * xbytes * 2              # double-buffered stream
        d_blk = sub(wb) * lane(tt) * xbytes * 2
        w_blk = C * sub(E_pad) * lane(tt) * xbytes * 2
        small = 2 * sub(E_pad) * 128 * 4 * 2 + sub(1) * lane(tb) * 4 * 2
        scratch = (2 * sub(wb) * lane(tb) + sub(E_pad) * lane(tb)
                   + 3 * sub(1) * lane(tb)) * 4
        return x_blk + d_blk + w_blk + small + scratch

    chosen = None
    for tb in tb_candidates:
        best = None
        for tt_c in tt_candidates:
            if tt_c is None:
                tt, t_pad, n_t = T8, T8, 1
            else:
                if tt_c >= T8:
                    continue
                tt, t_pad = tt_c, _round_up(T8, tt_c)
                n_t = t_pad // tt
            for wb_c in wb_candidates:
                if wb_c is None:
                    wb = _round_up(two_f, 8)
                    w_pad, n_w = wb, 1
                else:
                    if wb_c >= two_f:
                        continue
                    wb, w_pad = wb_c, _round_up(two_f, wb_c)
                    n_w = w_pad // wb
                if need_bytes(tb, tt, wb) > budget:
                    continue
                key = (n_t * n_w, -(tt * wb))
                if best is None or key < best[0]:
                    best = (key, dict(TB=tb, TT=tt, T_pad=t_pad, n_t=n_t,
                                      WB=wb, W_pad=w_pad, n_w=n_w))
        if best is not None:
            chosen = best[1]
            break

    if chosen is None:
        # Smallest tiles as a fallback; TODO(synk): truly huge T would want a different
        # spectral algorithm (the materialized [2F, T] DFT operator scales as T^2 in HBM).
        tb = tb_candidates[-1]
        tt = 128 if T8 > 128 else T8
        wb = 8 if two_f > 8 else _round_up(two_f, 8)
        t_pad = _round_up(T8, tt)
        w_pad = _round_up(two_f, wb)
        chosen = dict(TB=tb, TT=tt, T_pad=t_pad, n_t=t_pad // tt,
                      WB=wb, W_pad=w_pad, n_w=w_pad // wb)

    chosen["E_pad"] = E_pad
    chosen["B_pad"] = _round_up(B, 8) if B <= 32 else _round_up(B, chosen["TB"])
    chosen["vmem_limit"] = int(min(
        max(int(need_bytes(chosen["TB"], chosen["TT"], chosen["WB"]) * 1.5), 16 << 20),
        vmem_request_cap))
    return chosen


def combined_model(x, dft_cos, dft_sin, w_embed, b_embed, w_metric, w_rho, b_metric,
                   *, operand_dtype=jnp.bfloat16):
    B, C, T = x.shape
    E = w_embed.shape[1]
    F = dft_cos.shape[1]
    f32 = jnp.float32
    xbytes = jnp.dtype(operand_dtype).itemsize

    cfg = _choose_config(B, C, T, E, F, xbytes)
    TB, TT, WB = cfg["TB"], cfg["TT"], cfg["WB"]
    T_pad, W_pad, B_pad, E_pad = cfg["T_pad"], cfg["W_pad"], cfg["B_pad"], cfg["E_pad"]
    n_b, n_w, n_t = B_pad // TB, cfg["n_w"], cfg["n_t"]

    # ---- host-side layout plumbing (XLA reshapes / transposes / pads) -----------------
    # NOTE (perf review item 9): the [B,C,T] -> [C,T,B] transpose costs one extra HBM round
    # trip over x; accepted so that batch is the lane axis for every kernel operand.
    x3 = jnp.transpose(x, (1, 2, 0)).astype(operand_dtype)                   # [C, T, B]
    x3 = jnp.pad(x3, ((0, 0), (0, T_pad - T), (0, B_pad - B)))
    dft = jnp.concatenate([dft_cos.T, dft_sin.T], axis=0)                    # [2F, T]
    dft = jnp.pad(dft, ((0, W_pad - 2 * F), (0, T_pad - T))).astype(operand_dtype)
    w3 = jnp.transpose(w_embed.reshape(C, T, E), (0, 2, 1))                  # [C, E, T]
    w3 = jnp.pad(w3, ((0, 0), (0, E_pad - E), (0, T_pad - T))).astype(operand_dtype)
    be = jnp.pad(b_embed.reshape(E), (0, E_pad - E)).astype(f32).reshape(E_pad, 1)
    wm = jnp.pad(w_metric.reshape(E), (0, E_pad - E)).astype(f32).reshape(E_pad, 1)
    wr = w_rho.astype(f32).reshape(1)
    bm = b_metric.astype(f32).reshape(1)

    cost = pl.CostEstimate(
        flops=int(B) * int(8 * F * T + 2 * E * C * T),
        transcendentals=int(B),
        bytes_accessed=int((B * C * T + n_b * 2 * F * T + n_b * n_w * E * C * T) * xbytes
                           + B * 4),
    )

    out = pl.pallas_call(
        combined_kernel,
        out_shape=jax.ShapeDtypeStruct((1, B_pad), f32),
        grid_spec=pltpu.PrefetchScalarGridSpec(
            num_scalar_prefetch=0,
            grid=(n_b, n_w, n_t),
            in_specs=[
                pl.BlockSpec((C, TT, TB), lambda i, j, t: (0, t, i)),      # x (streams)
                pl.BlockSpec((WB, TT), lambda i, j, t: (j, t)),            # [cos;sin] op
                pl.BlockSpec((C, E_pad, TT), lambda i, j, t: (0, 0, t)),   # embedder weight
                pl.BlockSpec((E_pad, 1), lambda i, j, t: (0, 0)),          # embedder bias
                pl.BlockSpec((E_pad, 1), lambda i, j, t: (0, 0)),          # metric weight
                pl.BlockSpec(memory_space=pltpu.MemorySpace.SMEM),         # w_rho scalar
                pl.BlockSpec(memory_space=pltpu.MemorySpace.SMEM),         # b_metric scalar
            ],
            out_specs=pl.BlockSpec((1, TB), lambda i, j, t: (0, i)),
            scratch_shapes=[
                pltpu.VMEM((WB, TB), f32),       # hf spectrum partials (over time tiles)
                pltpu.VMEM((WB, TB), f32),       # lf spectrum partials
                pltpu.VMEM((E_pad, TB), f32),    # embedder partials
                pltpu.VMEM((1, TB), f32),        # num accumulator
                pltpu.VMEM((1, TB), f32),        # |H|^2 accumulator
                pltpu.VMEM((1, TB), f32),        # |L|^2 accumulator
            ],
        ),
        compiler_params=pltpu.CompilerParams(
            dimension_semantics=("parallel", "arbitrary", "arbitrary"),
            vmem_limit_bytes=cfg["vmem_limit"],
        ),
        cost_estimate=cost,
    )(x3, dft, w3, be, wm, wr, bm)

    return out[0, :B].reshape(B, 1)


def reference_forward(x, dft_cos, dft_sin, w_embed, b_embed, w_metric, w_rho, b_metric):
    """Pure-JAX reference using jnp.fft.rfft (mirrors the PyTorch semantics)."""
    B, C, T = x.shape
    emb = jnp.maximum(x.reshape(B, C * T) @ w_embed + b_embed, 0.0)
    H = jnp.fft.rfft(x[:, 0, :], axis=-1)
    L = jnp.fft.rfft(x[:, 1, :], axis=-1)
    num = jnp.sum(H * jnp.conj(L), axis=-1)
    rho = jnp.real(num / (jnp.linalg.norm(H, axis=-1) * jnp.linalg.norm(L, axis=-1) + 1e-8))
    rho = rho[:, None]
    return emb @ w_metric + rho * w_rho + b_metric


if __name__ == "__main__":
    # Small deterministic shapes: x = [batch=2, channels=2 (H, L strain), time=16].
    B, C, T, E = 2, 2, 16, 32
    F = T // 2 + 1

    key = jax.random.PRNGKey(0)
    kx, kwe, kbe, kwm, kwc, kbm = jax.random.split(key, 6)

    x = jax.random.normal(kx, (B, C, T), dtype=jnp.float32)

    # Synthetic, deterministic parameters for the stand-in submodules.
    w_embed = jax.random.normal(kwe, (C * T, E), dtype=jnp.float32) * 0.1
    b_embed = jax.random.normal(kbe, (1, E), dtype=jnp.float32) * 0.1
    w_metric = jax.random.normal(kwm, (E, 1), dtype=jnp.float32) * 0.1
    w_rho = jax.random.normal(kwc, (1, 1), dtype=jnp.float32) * 0.1
    b_metric = jax.random.normal(kbm, (1, 1), dtype=jnp.float32) * 0.1

    # Real DFT basis matrices (rfft as matmul).
    t_idx = np.arange(T)[:, None]
    f_idx = np.arange(F)[None, :]
    ang = 2.0 * np.pi * t_idx * f_idx / T
    dft_cos = jnp.asarray(np.cos(ang), dtype=jnp.float32)   # [T, F]
    dft_sin = jnp.asarray(np.sin(ang), dtype=jnp.float32)   # [T, F]

    ref = reference_forward(x, dft_cos, dft_sin,
                            w_embed, b_embed, w_metric, w_rho, b_metric)

    # f32-operand path: tight validation against the rfft reference.
    out_f32 = jax.block_until_ready(
        combined_model(x, dft_cos, dft_sin, w_embed, b_embed, w_metric, w_rho, b_metric,
                       operand_dtype=jnp.float32))
    np.testing.assert_allclose(np.asarray(out_f32), np.asarray(ref), rtol=1e-4, atol=1e-4)

    # bf16-operand path (default, MXU-native): looser tolerance for the operand cast.
    out_bf16 = jax.block_until_ready(
        combined_model(x, dft_cos, dft_sin, w_embed, b_embed, w_metric, w_rho, b_metric))
    np.testing.assert_allclose(np.asarray(out_bf16), np.asarray(ref), rtol=3e-2, atol=3e-2)

    print("KERNEL_OK")
</pallas_src>

<mosaic_0001>
module attributes {stable_mosaic.version = 11 : i64} {
  func.func @combined_kernel(%arg0: i32, %arg1: i32, %arg2: i32, %arg3: memref<2x16x8xf32, #tpu.memory_space<vmem>>, %arg4: memref<24x16xf32, #tpu.memory_space<vmem>>, %arg5: memref<2x32x16xf32, #tpu.memory_space<vmem>>, %arg6: memref<32x1xf32, #tpu.memory_space<vmem>>, %arg7: memref<32x1xf32, #tpu.memory_space<vmem>>, %arg8: memref<1xf32, #tpu.memory_space<smem>>, %arg9: memref<1xf32, #tpu.memory_space<smem>>, %arg10: memref<1x8xf32, #tpu.memory_space<vmem>>, %arg11: memref<24x8xf32, #tpu.memory_space<vmem>>, %arg12: memref<24x8xf32, #tpu.memory_space<vmem>>, %arg13: memref<32x8xf32, #tpu.memory_space<vmem>>, %arg14: memref<1x8xf32, #tpu.memory_space<vmem>>, %arg15: memref<1x8xf32, #tpu.memory_space<vmem>>, %arg16: memref<1x8xf32, #tpu.memory_space<vmem>>) attributes {dimension_semantics = [#tpu.dimension_semantics<parallel>, #tpu.dimension_semantics<arbitrary>, #tpu.dimension_semantics<arbitrary>], iteration_bounds = array<i64: 1, 1, 1>, scalar_prefetch = 0 : i64, scratch_operands = 6 : i64, tpu.core_type = #tpu.core_type<tc>, window_params = [{transform_indices = @transform_0, window_bounds = array<i64: 2, 16, 8>}, {transform_indices = @transform_1, window_bounds = array<i64: 24, 16>}, {transform_indices = @transform_2, window_bounds = array<i64: 2, 32, 16>}, {pipeline_mode = #tpu.pipeline_mode<synchronous>, transform_indices = @transform_3, window_bounds = array<i64: 32, 1>}, {pipeline_mode = #tpu.pipeline_mode<synchronous>, transform_indices = @transform_4, window_bounds = array<i64: 32, 1>}, {transform_indices = @transform_5, window_bounds = array<i64: 1>}, {transform_indices = @transform_6, window_bounds = array<i64: 1>}, {transform_indices = @transform_7, window_bounds = array<i64: 1, 8>}]} {
    %c0_i32 = arith.constant 0 : i32
    %0 = arith.cmpi eq, %arg1, %c0_i32 : i32
    %c0_i32_0 = arith.constant 0 : i32
    %1 = arith.cmpi eq, %arg2, %c0_i32_0 : i32
    %2 = arith.andi %0, %1 : i1
    %3 = arith.extui %2 : i1 to i32
    %c0_i32_1 = arith.constant 0 : i32
    %4 = arith.cmpi ne, %3, %c0_i32_1 : i32
    scf.if %4 {
      %cst_23 = arith.constant 0.000000e+00 : f32
      %27 = vector.broadcast %cst_23 : f32 to vector<1x8xf32>
      %c0_24 = arith.constant 0 : index
      %c0_25 = arith.constant 0 : index
      %28 = vector.load %arg14[%c0_24, %c0_25] : memref<1x8xf32, #tpu.memory_space<vmem>>, vector<1x8xf32>
      tpu.vector_store %arg14[%c0_24, %c0_25], %27 {strides = array<i32>} : memref<1x8xf32, #tpu.memory_space<vmem>>, vector<1x8xf32>,
      %cst_26 = arith.constant 0.000000e+00 : f32
      %29 = vector.broadcast %cst_26 : f32 to vector<1x8xf32>
      %c0_27 = arith.constant 0 : index
      %c0_28 = arith.constant 0 : index
      %30 = vector.load %arg15[%c0_27, %c0_28] : memref<1x8xf32, #tpu.memory_space<vmem>>, vector<1x8xf32>
      tpu.vector_store %arg15[%c0_27, %c0_28], %29 {strides = array<i32>} : memref<1x8xf32, #tpu.memory_space<vmem>>, vector<1x8xf32>,
      %cst_29 = arith.constant 0.000000e+00 : f32
      %31 = vector.broadcast %cst_29 : f32 to vector<1x8xf32>
      %c0_30 = arith.constant 0 : index
      %c0_31 = arith.constant 0 : index
      %32 = vector.load %arg16[%c0_30, %c0_31] : memref<1x8xf32, #tpu.memory_space<vmem>>, vector<1x8xf32>
      tpu.vector_store %arg16[%c0_30, %c0_31], %31 {strides = array<i32>} : memref<1x8xf32, #tpu.memory_space<vmem>>, vector<1x8xf32>,
      %cst_32 = arith.constant 0.000000e+00 : f32
      %33 = vector.broadcast %cst_32 : f32 to vector<32x8xf32>
      %c0_33 = arith.constant 0 : index
      %c0_34 = arith.constant 0 : index
      %34 = vector.load %arg13[%c0_33, %c0_34] : memref<32x8xf32, #tpu.memory_space<vmem>>, vector<32x8xf32>
      tpu.vector_store %arg13[%c0_33, %c0_34], %33 {strides = array<i32>} : memref<32x8xf32, #tpu.memory_space<vmem>>, vector<32x8xf32>,
    } else {
    }
    %c0_i32_2 = arith.constant 0 : i32
    %5 = arith.cmpi eq, %arg2, %c0_i32_2 : i32
    %6 = arith.extui %5 : i1 to i32
    %c0_i32_3 = arith.constant 0 : i32
    %7 = arith.cmpi ne, %6, %c0_i32_3 : i32
    scf.if %7 {
      %cst_23 = arith.constant 0.000000e+00 : f32
      %27 = vector.broadcast %cst_23 : f32 to vector<24x8xf32>
      %c0_24 = arith.constant 0 : index
      %c0_25 = arith.constant 0 : index
      %28 = vector.load %arg11[%c0_24, %c0_25] : memref<24x8xf32, #tpu.memory_space<vmem>>, vector<24x8xf32>
      tpu.vector_store %arg11[%c0_24, %c0_25], %27 {strides = array<i32>} : memref<24x8xf32, #tpu.memory_space<vmem>>, vector<24x8xf32>,
      %cst_26 = arith.constant 0.000000e+00 : f32
      %29 = vector.broadcast %cst_26 : f32 to vector<24x8xf32>
      %c0_27 = arith.constant 0 : index
      %c0_28 = arith.constant 0 : index
      %30 = vector.load %arg12[%c0_27, %c0_28] : memref<24x8xf32, #tpu.memory_space<vmem>>, vector<24x8xf32>
      tpu.vector_store %arg12[%c0_27, %c0_28], %29 {strides = array<i32>} : memref<24x8xf32, #tpu.memory_space<vmem>>, vector<24x8xf32>,
    } else {
    }
    %c0 = arith.constant 0 : index
    %c0_4 = arith.constant 0 : index
    %c0_5 = arith.constant 0 : index
    %8 = vector.load %arg3[%c0, %c0_4, %c0_5] : memref<2x16x8xf32, #tpu.memory_space<vmem>>, vector<1x16x8xf32>
    %9 = vector.shape_cast %8 : vector<1x16x8xf32> to vector<16x8xf32>
    %c1 = arith.constant 1 : index
    %c0_6 = arith.constant 0 : index
    %c0_7 = arith.constant 0 : index
    %10 = vector.load %arg3[%c1, %c0_6, %c0_7] : memref<2x16x8xf32, #tpu.memory_space<vmem>>, vector<1x16x8xf32>
    %11 = vector.shape_cast %10 : vector<1x16x8xf32> to vector<16x8xf32>
    %c0_8 = arith.constant 0 : index
    %c0_9 = arith.constant 0 : index
    %12 = vector.load %arg4[%c0_8, %c0_9] : memref<24x16xf32, #tpu.memory_space<vmem>>, vector<24x16xf32>
    %c0_10 = arith.constant 0 : index
    %c0_11 = arith.constant 0 : index
    %13 = vector.load %arg11[%c0_10, %c0_11] : memref<24x8xf32, #tpu.memory_space<vmem>>, vector<24x8xf32>
    %cst = arith.constant dense<0.000000e+00> : vector<24x8xf32>
    %14 = tpu.matmul %12, %9, %cst {dimension_numbers = #tpu.dot_dimension_numbers<[1], [0], [0], [1], [0, 0, 1, 1], [], []>} : vector<24x16xf32>, vector<16x8xf32>, vector<24x8xf32> -> vector<24x8xf32>
    %15 = arith.addf %13, %14 : vector<24x8xf32>
    %c0_12 = arith.constant 0 : index
    %c0_13 = arith.constant 0 : index
    %16 = vector.load %arg11[%c0_12, %c0_13] : memref<24x8xf32, #tpu.memory_space<vmem>>, vector<24x8xf32>
    tpu.vector_store %arg11[%c0_12, %c0_13], %15 {strides = array<i32>} : memref<24x8xf32, #tpu.memory_space<vmem>>, vector<24x8xf32>,
    %c0_14 = arith.constant 0 : index
    %c0_15 = arith.constant 0 : index
    %17 = vector.load %arg12[%c0_14, %c0_15] : memref<24x8xf32, #tpu.memory_space<vmem>>, vector<24x8xf32>
    %cst_16 = arith.constant dense<0.000000e+00> : vector<24x8xf32>
    %18 = tpu.matmul %12, %11, %cst_16 {dimension_numbers = #tpu.dot_dimension_numbers<[1], [0], [0], [1], [0, 0, 1, 1], [], []>} : vector<24x16xf32>, vector<16x8xf32>, vector<24x8xf32> -> vector<24x8xf32>
    %19 = arith.addf %17, %18 : vector<24x8xf32>
    %c0_17 = arith.constant 0 : index
    %c0_18 = arith.constant 0 : index
    %20 = vector.load %arg12[%c0_17, %c0_18] : memref<24x8xf32, #tpu.memory_space<vmem>>, vector<24x8xf32>
    tpu.vector_store %arg12[%c0_17, %c0_18], %19 {strides = array<i32>} : memref<24x8xf32, #tpu.memory_space<vmem>>, vector<24x8xf32>,
    %c0_i32_19 = arith.constant 0 : i32
    %21 = arith.cmpi eq, %arg1, %c0_i32_19 : i32
    %22 = arith.extui %21 : i1 to i32
    %c0_i32_20 = arith.constant 0 : i32
    %23 = arith.cmpi ne, %22, %c0_i32_20 : i32
    scf.if %23 {
      %c0_23 = arith.constant 0 : index
      %c0_24 = arith.constant 0 : index
      %27 = vector.load %arg13[%c0_23, %c0_24] : memref<32x8xf32, #tpu.memory_space<vmem>>, vector<32x8xf32>
      %c0_25 = arith.constant 0 : index
      %c0_26 = arith.constant 0 : index
      %c0_27 = arith.constant 0 : index
      %28 = vector.load %arg5[%c0_25, %c0_26, %c0_27] : memref<2x32x16xf32, #tpu.memory_space<vmem>>, vector<1x32x16xf32>
      %29 = vector.shape_cast %28 : vector<1x32x16xf32> to vector<32x16xf32>
      %cst_28 = arith.constant dense<0.000000e+00> : vector<32x8xf32>
      %30 = tpu.matmul %29, %9, %cst_28 {dimension_numbers = #tpu.dot_dimension_numbers<[1], [0], [0], [1], [0, 0, 1, 1], [], []>} : vector<32x16xf32>, vector<16x8xf32>, vector<32x8xf32> -> vector<32x8xf32>
      %c1_29 = arith.constant 1 : index
      %c0_30 = arith.constant 0 : index
      %c0_31 = arith.constant 0 : index
      %31 = vector.load %arg5[%c1_29, %c0_30, %c0_31] : memref<2x32x16xf32, #tpu.memory_space<vmem>>, vector<1x32x16xf32>
      %32 = vector.shape_cast %31 : vector<1x32x16xf32> to vector<32x16xf32>
      %cst_32 = arith.constant dense<0.000000e+00> : vector<32x8xf32>
      %33 = tpu.matmul %32, %11, %cst_32 {dimension_numbers = #tpu.dot_dimension_numbers<[1], [0], [0], [1], [0, 0, 1, 1], [], []>} : vector<32x16xf32>, vector<16x8xf32>, vector<32x8xf32> -> vector<32x8xf32>
      %34 = arith.addf %30, %33 : vector<32x8xf32>
      %35 = arith.addf %27, %34 : vector<32x8xf32>
      %c0_33 = arith.constant 0 : index
      %c0_34 = arith.constant 0 : index
      %36 = vector.load %arg13[%c0_33, %c0_34] : memref<32x8xf32, #tpu.memory_space<vmem>>, vector<32x8xf32>
      tpu.vector_store %arg13[%c0_33, %c0_34], %35 {strides = array<i32>} : memref<32x8xf32, #tpu.memory_space<vmem>>, vector<32x8xf32>,
    } else {
    }
    %c0_i32_21 = arith.constant 0 : i32
    %24 = arith.cmpi eq, %arg2, %c0_i32_21 : i32
    %25 = arith.extui %24 : i1 to i32
    %c0_i32_22 = arith.constant 0 : i32
    %26 = arith.cmpi ne, %25, %c0_i32_22 : i32
    scf.if %26 {
      %c0_23 = arith.constant 0 : index
      %c0_24 = arith.constant 0 : index
      %27 = vector.load %arg11[%c0_23, %c0_24] : memref<24x8xf32, #tpu.memory_space<vmem>>, vector<24x8xf32>
      %c0_25 = arith.constant 0 : index
      %c0_26 = arith.constant 0 : index
      %28 = vector.load %arg12[%c0_25, %c0_26] : memref<24x8xf32, #tpu.memory_space<vmem>>, vector<24x8xf32>
      %c0_27 = arith.constant 0 : index
      %c0_28 = arith.constant 0 : index
      %29 = vector.load %arg14[%c0_27, %c0_28] : memref<1x8xf32, #tpu.memory_space<vmem>>, vector<1x8xf32>
      %30 = arith.mulf %27, %28 : vector<24x8xf32>
      %cst_29 = arith.constant dense<0.000000e+00> : vector<8xf32>
      %31 = vector.multi_reduction <add>, %30, %cst_29 [0] : vector<24x8xf32> to vector<8xf32>
      %32 = vector.shape_cast %31 : vector<8xf32> to vector<1x8xf32>
      %33 = arith.addf %29, %32 : vector<1x8xf32>
      %c0_30 = arith.constant 0 : index
      %c0_31 = arith.constant 0 : index
      %34 = vector.load %arg14[%c0_30, %c0_31] : memref<1x8xf32, #tpu.memory_space<vmem>>, vector<1x8xf32>
      tpu.vector_store %arg14[%c0_30, %c0_31], %33 {strides = array<i32>} : memref<1x8xf32, #tpu.memory_space<vmem>>, vector<1x8xf32>,
      %c0_32 = arith.constant 0 : index
      %c0_33 = arith.constant 0 : index
      %35 = vector.load %arg15[%c0_32, %c0_33] : memref<1x8xf32, #tpu.memory_space<vmem>>, vector<1x8xf32>
      %36 = arith.mulf %27, %27 : vector<24x8xf32>
      %cst_34 = arith.constant dense<0.000000e+00> : vector<8xf32>
      %37 = vector.multi_reduction <add>, %36, %cst_34 [0] : vector<24x8xf32> to vector<8xf32>
      %38 = vector.shape_cast %37 : vector<8xf32> to vector<1x8xf32>
      %39 = arith.addf %35, %38 : vector<1x8xf32>
      %c0_35 = arith.constant 0 : index
      %c0_36 = arith.constant 0 : index
      %40 = vector.load %arg15[%c0_35, %c0_36] : memref<1x8xf32, #tpu.memory_space<vmem>>, vector<1x8xf32>
      tpu.vector_store %arg15[%c0_35, %c0_36], %39 {strides = array<i32>} : memref<1x8xf32, #tpu.memory_space<vmem>>, vector<1x8xf32>,
      %c0_37 = arith.constant 0 : index
      %c0_38 = arith.constant 0 : index
      %41 = vector.load %arg16[%c0_37, %c0_38] : memref<1x8xf32, #tpu.memory_space<vmem>>, vector<1x8xf32>
      %42 = arith.mulf %28, %28 : vector<24x8xf32>
      %cst_39 = arith.constant dense<0.000000e+00> : vector<8xf32>
      %43 = vector.multi_reduction <add>, %42, %cst_39 [0] : vector<24x8xf32> to vector<8xf32>
      %44 = vector.shape_cast %43 : vector<8xf32> to vector<1x8xf32>
      %45 = arith.addf %41, %44 : vector<1x8xf32>
      %c0_40 = arith.constant 0 : index
      %c0_41 = arith.constant 0 : index
      %46 = vector.load %arg16[%c0_40, %c0_41] : memref<1x8xf32, #tpu.memory_space<vmem>>, vector<1x8xf32>
      tpu.vector_store %arg16[%c0_40, %c0_41], %45 {strides = array<i32>} : memref<1x8xf32, #tpu.memory_space<vmem>>, vector<1x8xf32>,
      %c0_i32_42 = arith.constant 0 : i32
      %47 = arith.cmpi eq, %arg1, %c0_i32_42 : i32
      %48 = arith.extui %47 : i1 to i32
      %c0_i32_43 = arith.constant 0 : i32
      %49 = arith.cmpi ne, %48, %c0_i32_43 : i32
      scf.if %49 {
        %c0_44 = arith.constant 0 : index
        %c0_45 = arith.constant 0 : index
        %50 = vector.load %arg13[%c0_44, %c0_45] : memref<32x8xf32, #tpu.memory_space<vmem>>, vector<32x8xf32>
        %c0_46 = arith.constant 0 : index
        %c0_47 = arith.constant 0 : index
        %51 = vector.load %arg6[%c0_46, %c0_47] : memref<32x1xf32, #tpu.memory_space<vmem>>, vector<32x1xf32>
        %52 = vector.broadcast %51 : vector<32x1xf32> to vector<32x8xf32>
        %53 = arith.addf %50, %52 : vector<32x8xf32>
        %cst_48 = arith.constant 0.000000e+00 : f32
        %54 = vector.broadcast %cst_48 : f32 to vector<32x8xf32>
        %55 = arith.maximumf %53, %54 : vector<32x8xf32>
        %c0_49 = arith.constant 0 : index
        %c0_50 = arith.constant 0 : index
        %56 = vector.load %arg7[%c0_49, %c0_50] : memref<32x1xf32, #tpu.memory_space<vmem>>, vector<32x1xf32>
        %57 = vector.broadcast %56 : vector<32x1xf32> to vector<32x8xf32>
        %58 = arith.mulf %55, %57 : vector<32x8xf32>
        %cst_51 = arith.constant dense<0.000000e+00> : vector<8xf32>
        %59 = vector.multi_reduction <add>, %58, %cst_51 [0] : vector<32x8xf32> to vector<8xf32>
        %60 = vector.shape_cast %59 : vector<8xf32> to vector<1x8xf32>
        %c0_52 = arith.constant 0 : index
        %c0_53 = arith.constant 0 : index
        %61 = vector.load %arg15[%c0_52, %c0_53] : memref<1x8xf32, #tpu.memory_space<vmem>>, vector<1x8xf32>
        %c0_54 = arith.constant 0 : index
        %c0_55 = arith.constant 0 : index
        %62 = vector.load %arg16[%c0_54, %c0_55] : memref<1x8xf32, #tpu.memory_space<vmem>>, vector<1x8xf32>
        %63 = arith.mulf %61, %62 : vector<1x8xf32>
        %64 = math.sqrt %63 : vector<1x8xf32>
        %cst_56 = arith.constant 9.99999993E-9 : f32
        %65 = vector.broadcast %cst_56 : f32 to vector<1x8xf32>
        %66 = arith.addf %64, %65 : vector<1x8xf32>
        %c0_57 = arith.constant 0 : index
        %c0_58 = arith.constant 0 : index
        %67 = vector.load %arg14[%c0_57, %c0_58] : memref<1x8xf32, #tpu.memory_space<vmem>>, vector<1x8xf32>
        %68 = arith.divf %67, %66 : vector<1x8xf32>
        %c0_59 = arith.constant 0 : index
        %69 = memref.load %arg8[%c0_59] : memref<1xf32, #tpu.memory_space<smem>>
        %70 = vector.broadcast %69 : f32 to vector<1x8xf32>
        %71 = arith.mulf %68, %70 : vector<1x8xf32>
        %72 = arith.addf %60, %71 : vector<1x8xf32>
        %c0_60 = arith.constant 0 : index
        %73 = memref.load %arg9[%c0_60] : memref<1xf32, #tpu.memory_space<smem>>
        %74 = vector.broadcast %73 : f32 to vector<1x8xf32>
        %75 = arith.addf %72, %74 : vector<1x8xf32>
        %c0_61 = arith.constant 0 : index
        %c0_62 = arith.constant 0 : index
        %76 = vector.load %arg10[%c0_61, %c0_62] : memref<1x8xf32, #tpu.memory_space<vmem>>, vector<1x8xf32>
        tpu.vector_store %arg10[%c0_61, %c0_62], %75 {strides = array<i32>} : memref<1x8xf32, #tpu.memory_space<vmem>>, vector<1x8xf32>,
      } else {
      }
    } else {
    }
    return
  }
  func.func @transform_0(%arg0: i32, %arg1: i32, %arg2: i32) -> (i32, i32, i32) {
    %c0_i32 = arith.constant 0 : i32
    %c0_i32_0 = arith.constant 0 : i32
    return %c0_i32, %arg2, %arg0 : i32, i32, i32
  }
  func.func @transform_1(%arg0: i32, %arg1: i32, %arg2: i32) -> (i32, i32) {
    %c0_i32 = arith.constant 0 : i32
    return %arg1, %arg2 : i32, i32
  }
  func.func @transform_2(%arg0: i32, %arg1: i32, %arg2: i32) -> (i32, i32, i32) {
    %c0_i32 = arith.constant 0 : i32
    %c0_i32_0 = arith.constant 0 : i32
    %c0_i32_1 = arith.constant 0 : i32
    return %c0_i32, %c0_i32_0, %arg2 : i32, i32, i32
  }
  func.func @transform_3(%arg0: i32, %arg1: i32, %arg2: i32) -> (i32, i32) {
    %c0_i32 = arith.constant 0 : i32
    %c0_i32_0 = arith.constant 0 : i32
    %c0_i32_1 = arith.constant 0 : i32
    return %c0_i32, %c0_i32_0 : i32, i32
  }
  func.func @transform_4(%arg0: i32, %arg1: i32, %arg2: i32) -> (i32, i32) {
    %c0_i32 = arith.constant 0 : i32
    %c0_i32_0 = arith.constant 0 : i32
    %c0_i32_1 = arith.constant 0 : i32
    return %c0_i32, %c0_i32_0 : i32, i32
  }
  func.func @transform_5(%arg0: i32, %arg1: i32, %arg2: i32) -> i32 {
    %c0_i32 = arith.constant 0 : i32
    %c0_i32_0 = arith.constant 0 : i32
    return %c0_i32 : i32
  }
  func.func @transform_6(%arg0: i32, %arg1: i32, %arg2: i32) -> i32 {
    %c0_i32 = arith.constant 0 : i32
    %c0_i32_0 = arith.constant 0 : i32
    return %c0_i32 : i32
  }
  func.func @transform_7(%arg0: i32, %arg1: i32, %arg2: i32) -> (i32, i32) {
    %c0_i32 = arith.constant 0 : i32
    %c0_i32_0 = arith.constant 0 : i32
    return %c0_i32, %arg0 : i32, i32
  }
}

</mosaic_0001>

<llo_original>
// kernel: tpu_custom_call.1
$region0: #{tpu_custom_call.1}
  #allocation0 [shape = 'u32[]', space=smem, size = 0x4, offset = 0x4, fixed_abs, tag = 'smem constant byte address 0x4 - core index']
  #allocation1 [shape = 'u32[144,128]{1,0:T(1,128)}', space=vmem, size = 0x12000, scoped, tag = 'internal scratch']
  #allocation2 [shape = 'f32[24,8]{1,0:T(8,128)}', space=vmem, size = 0x3000, scoped, tag = 'scratch operand']
  #allocation3 [shape = 'f32[24,8]{1,0:T(8,128)}', space=vmem, size = 0x3000, scoped, tag = 'scratch operand']
  #allocation4 [shape = 'f32[32,8]{1,0:T(8,128)}', space=vmem, size = 0x4000, scoped, tag = 'scratch operand']
  #allocation5 [shape = 'f32[1,8]{1,0:T(1,128)}', space=vmem, size = 0x200, scoped, tag = 'scratch operand']
  #allocation6 [shape = 'f32[1,8]{1,0:T(1,128)}', space=vmem, size = 0x200, scoped, tag = 'scratch operand']
  #allocation7 [shape = 'f32[1,8]{1,0:T(1,128)}', space=vmem, size = 0x200, scoped, tag = 'scratch operand']
  #allocation8 [shape = 'f32[1]{0:T(128)S(6)}', space=smem, size = 0x200, scoped, tag = 'scoped memory for tpu_custom_call.1']
  #allocation9 [shape = 'f32[1]{0:T(128)S(6)}', space=smem, size = 0x200, scoped, tag = 'scoped memory for tpu_custom_call.1']
  %s0 = inlined_call_operand.vmem [shape: f32[2,16,8], index: 0, kind: input, shape index: {}]
  %s1 = inlined_call_operand.vmem [shape: f32[24,16], index: 1, kind: input, shape index: {}]
  %s2 = inlined_call_operand.vmem [shape: f32[2,32,16], index: 2, kind: input, shape index: {}]
  %s3 = inlined_call_operand.vmem [shape: f32[32,1], index: 3, kind: input, shape index: {}]
  %s4 = inlined_call_operand.vmem [shape: f32[32,1], index: 4, kind: input, shape index: {}]
  %s5 = inlined_call_operand.<no memory space> [shape: f32[1], index: 5, kind: input, shape index: {}]
  %s6 = inlined_call_operand.<no memory space> [shape: f32[1], index: 6, kind: input, shape index: {}]
  %s7 = inlined_call_operand.hbm [shape: f32[1,8], index: 7, kind: output, shape index: {}]
  %s8 = sld [smem:[#allocation0]]
  $region58: #{tpu_custom_call.1} parent=0
    _
  %s10 = ssub.s32 1, %s8
  %s11 = scalar_select 0, %s10, %s8
  %12 = sst [smem:[#allocation8]] %s5
  %13 = sst [smem:[#allocation9]] %s6
  $region1: #{tpu_custom_call.1} parent=0
    #allocation10 [shape = 'u8[512]{0}', space=vmem, size = 0x400, scoped, tag = 'output window, operand 0, single buffered']
    #allocation11 [shape = 's32[1]{0}', space=sflag, size = 0x4, scoped, tag = 'scoped memory for tpu_custom_call.1']
    %14 = vsyncpa [#allocation11], 0
    // Predicated region
    $region2: #{tpu_custom_call.1} parent=1 // pred_check
      _
    $region3: #{tpu_custom_call.1} parent=1 // pred_check_branch
      %16 = sbr.rel (0) target = $region5
    $region4: #{tpu_custom_call.1} parent=1 // pred_region
      _
    $region5: #{tpu_custom_call.1} parent=1 // pred_fallthru
      _
    // Predicated region
    $region6: #{tpu_custom_call.1} parent=1 // pred_check
      _
    $region7: #{tpu_custom_call.1} parent=1 // pred_check_branch
      %18 = sbr.rel (0) target = $region9
    $region8: #{tpu_custom_call.1} parent=1 // pred_region
      _
    $region9: #{tpu_custom_call.1} parent=1 // pred_fallthru
      _
    // Predicated region
    $region10: #{tpu_custom_call.1} parent=1 // pred_check
      _
    $region11: #{tpu_custom_call.1} parent=1 // pred_check_branch
      %20 = sbr.rel (0) target = $region13
    $region12: #{tpu_custom_call.1} parent=1 // pred_region
      _
    $region13: #{tpu_custom_call.1} parent=1 // pred_fallthru
      _
    // Predicated region
    $region14: #{tpu_custom_call.1} parent=1 // pred_check
      _
    $region15: #{tpu_custom_call.1} parent=1 // pred_check_branch
      %22 = sbr.rel (0) target = $region17
    $region16: #{tpu_custom_call.1} parent=1 // pred_region
      _
    $region17: #{tpu_custom_call.1} parent=1 // pred_fallthru
      _
    // Predicated region
    $region18: #{tpu_custom_call.1} parent=1 // pred_check
      _
    $region19: #{tpu_custom_call.1} parent=1 // pred_check_branch
      %24 = sbr.rel (0) target = $region21
    $region20: #{tpu_custom_call.1} parent=1 // pred_region
      _
    $region21: #{tpu_custom_call.1} parent=1 // pred_fallthru
      _
    // Predicated region
    $region22: #{tpu_custom_call.1} parent=1 // pred_check
      _
    $region23: #{tpu_custom_call.1} parent=1 // pred_check_branch
      %26 = sbr.rel (0) target = $region25
    $region24: #{tpu_custom_call.1} parent=1 // pred_region
      _
    $region25: #{tpu_custom_call.1} parent=1 // pred_fallthru
      _
    // Predicated region
    $region26: #{tpu_custom_call.1} parent=1 // pred_check
      _
    $region27: #{tpu_custom_call.1} parent=1 // pred_check_branch
      %28 = sbr.rel (0) target = $region29
    $region28: #{tpu_custom_call.1} parent=1 // pred_region
      _
    $region29: #{tpu_custom_call.1} parent=1 // pred_fallthru
      _
    %p29 = scmp.eq.s32.totalorder 0, 0
    %p30 = scmp.eq.s32.totalorder 0, 0
    %p31 = pnand %p29, %p30
    %p32 = pneg %p31
    // Predicated region
    $region30: #{tpu_custom_call.1} parent=1 // pred_check
      _
    $region31: #{tpu_custom_call.1} parent=1 // pred_check_branch
      %34 = sbr.rel (%p31) target = $region33
    $region32: #{tpu_custom_call.1} parent=1 // pred_region
      %vm35 = vcmask 57344
      %36 = vst.msk [vmem:[#allocation5] sm:$0x1] %vm35, 0.0
      %37 = vst.msk [vmem:[#allocation6] sm:$0x1] %vm35, 0.0
      %38 = vst.msk [vmem:[#allocation7] sm:$0x1] %vm35, 0.0
      %vm39 = vcmask 64512
      %40 = vst.msk [vmem:[#allocation4] sm:$0xff] %vm39, 0.0
      %41 = vst.msk [vmem:[#allocation4 + $0x8] sm:$0xff] %vm39, 0.0
      %42 = vst.msk [vmem:[#allocation4 + $0x10] sm:$0xff] %vm39, 0.0
      %43 = vst.msk [vmem:[#allocation4 + $0x18] sm:$0xff] %vm39, 0.0
    $region33: #{tpu_custom_call.1} parent=1 // pred_fallthru
      _
    // Predicated region
    $region34: #{tpu_custom_call.1} parent=1 // pred_check
      %p44 = pneg %p30
    $region35: #{tpu_custom_call.1} parent=1 // pred_check_branch
      %46 = sbr.rel (%p44) target = $region37
    $region36: #{tpu_custom_call.1} parent=1 // pred_region
      %vm47 = vcmask 64512
      %48 = vst.msk [vmem:[#allocation2] sm:$0xff] %vm47, 0.0
      %49 = vst.msk [vmem:[#allocation2 + $0x8] sm:$0xff] %vm47, 0.0
      %50 = vst.msk [vmem:[#allocation2 + $0x10] sm:$0xff] %vm47, 0.0
      %51 = vst.msk [vmem:[#allocation3] sm:$0xff] %vm47, 0.0
      %52 = vst.msk [vmem:[#allocation3 + $0x8] sm:$0xff] %vm47, 0.0
      %53 = vst.msk [vmem:[#allocation3 + $0x10] sm:$0xff] %vm47, 0.0
    $region37: #{tpu_custom_call.1} parent=1 // pred_fallthru
      _
    %v54 = vld [vmem:[%s0] sm:$0xff]
    %v55 = vld [vmem:[%s0 + $0x8] sm:$0xff]
    %s56 = scalar_lea.vmem %s0, 16
    %v57 = vld [vmem:[%s56] sm:$0xff]
    %v58 = vld [vmem:[%s56 + $0x8] sm:$0xff]
    %v59 = vld [vmem:[%s1] sm:$0xff]
    %v60 = vld [vmem:[%s1 + $0x8] sm:$0xff]
    %v61 = vld [vmem:[%s1 + $0x10] sm:$0xff]
    %v62 = vld [vmem:[#allocation2] sm:$0xff]
    %v63 = vld [vmem:[#allocation2 + $0x8] sm:$0xff]
    %v64 = vld [vmem:[#allocation2 + $0x10] sm:$0xff]
    %vm65 = vcmask 130048
    %v67 = vsel %vm65, %v59, 0
    %v70 = vsel %vm65, %v60, 0
    %v73 = vsel %vm65, %v61, 0
    %75 = vmatprep.subr.mxu0 0.0
    %76 = vmatpush1.msra.mxu0 %v54
    %77 = vmatprep.subr.mxu0 0.0
    %78 = vmatpush1.msra.mxu0 %v55
    %79 = vmatprep.subr.mxu0 0.0
    %80 = vmatpush1.msra.mxu0 0.0
    %81 = vmatprep.subr.mxu0 0.0
    %82 = vmatpush1.msra.mxu0 0.0
    %83 = vmatprep.subr.mxu0 0.0
    %84 = vmatpush1.msra.mxu0 0.0
    %85 = vmatprep.subr.mxu0 0.0
    %86 = vmatpush1.msra.mxu0 0.0
    %87 = vmatprep.subr.mxu0 0.0
    %88 = vmatpush1.msra.mxu0 0.0
    %89 = vmatprep.subr.mxu0 0.0
    %90 = vmatpush1.msra.mxu0 0.0
    %91 = vmatprep.subr.mxu0 0.0
    %92 = vmatpush1.msra.mxu0 0.0
    %93 = vmatprep.subr.mxu0 0.0
    %94 = vmatpush1.msra.mxu0 0.0
    %95 = vmatprep.subr.mxu0 0.0
    %96 = vmatpush1.msra.mxu0 0.0
    %97 = vmatprep.subr.mxu0 0.0
    %98 = vmatpush1.msra.mxu0 0.0
    %99 = vmatprep.subr.mxu0 0.0
    %100 = vmatpush1.msra.mxu0 0.0
    %101 = vmatprep.subr.mxu0 0.0
    %102 = vmatpush1.msra.mxu0 0.0
    %103 = vmatprep.subr.mxu0 0.0
    %104 = vmatpush1.msra.mxu0 0.0
    %105 = vmatprep.subr.mxu0 0.0
    %106 = vmatpush1.msra.mxu0 0.0
    %107 = vmatprep.subr.mxu0 0.0
    %108 = vmatpush1.msra.mxu0 0.0
    %109 = vmatprep.subr.mxu0 0.0
    %110 = vmatpush1.msra.mxu0 0.0
    %111 = vmatprep.subr.mxu0 0.0
    %112 = vmatpush1.msra.mxu0 0.0
    %113 = vmatprep.subr.mxu0 0.0
    %114 = vmatpush1.msra.mxu0 0.0
    %115 = vmatprep.subr.mxu0 0.0
    %116 = vmatpush1.msra.mxu0 0.0
    %117 = vmatprep.subr.mxu0 0.0
    %118 = vmatpush1.msra.mxu0 0.0
    %119 = vmatprep.subr.mxu0 0.0
    %120 = vmatpush1.msra.mxu0 0.0
    %121 = vmatprep.subr.mxu0 0.0
    %122 = vmatpush1.msra.mxu0 0.0
    %123 = vmatprep.subr.mxu0 0.0
    %124 = vmatpush1.msra.mxu0 0.0
    %125 = vmatprep.subr.mxu0 0.0
    %126 = vmatpush1.msra.mxu0 0.0
    %127 = vmatprep.subr.mxu0 0.0
    %128 = vmatpush1.msra.mxu0 0.0
    %129 = vmatprep.subr.mxu0 0.0
    %130 = vmatpush1.msra.mxu0 0.0
    %131 = vmatprep.subr.mxu0 0.0
    %132 = vmatpush1.msra.mxu0 0.0
    %133 = vmatprep.subr.mxu0 0.0
    %134 = vmatpush1.msra.mxu0 0.0
    %135 = vmatprep.subr.mxu0 0.0
    %136 = vmatpush1.msra.mxu0 0.0
    %137 = vmatprep.subr.mxu0 0.0
    %138 = vmatpush1.msra.mxu0 0.0
    %139 = vmatprep.mubr.f32.mxu0 0.0
    %140 = vmatmul.mubr.f32.gmra.mrb[0].mxu0 %v67
    %v141 = vpop.f32.mrb[0].mxu0
    %v142 = vadd.f32 0.0, %v141
    %v143 = vpop.f32.mrb[0].mxu0
    %144 = vmatprep.mubr.f32.mxu0 0.0
    %145 = vmatmul.mubr.f32.gmra.mrb[0].mxu0 %v70
    %v146 = vpop.f32.mrb[0].mxu0
    %v147 = vadd.f32 0.0, %v146
    %v148 = vpop.f32.mrb[0].mxu0
    %149 = vmatprep.mubr.f32.mxu0 0.0
    %150 = vmatmul.mubr.f32.gmra.mrb[0].mxu0 %v73
    %v151 = vpop.f32.mrb[0].mxu0
    %v152 = vadd.f32 0.0, %v151
    %v153 = vpop.f32.mrb[0].mxu0
    %154 = vdwg.mxu0
    %v155 = vadd.f32 %v62, %v142
    %v156 = vadd.f32 %v63, %v147
    %v157 = vadd.f32 %v64, %v152
    %vm158 = vcmask 64512
    %159 = vst.msk [vmem:[#allocation2] sm:$0xff] %vm158, %v155
    %160 = vst.msk [vmem:[#allocation2 + $0x8] sm:$0xff] %vm158, %v156
    %161 = vst.msk [vmem:[#allocation2 + $0x10] sm:$0xff] %vm158, %v157
    %v162 = vld [vmem:[#allocation3] sm:$0xff]
    %v163 = vld [vmem:[#allocation3 + $0x8] sm:$0xff]
    %v164 = vld [vmem:[#allocation3 + $0x10] sm:$0xff]
    %165 = vmatprep.subr.mxu0 0.0
    %166 = vmatpush1.msra.mxu0 %v57
    %167 = vmatprep.subr.mxu0 0.0
    %168 = vmatpush1.msra.mxu0 %v58
    %169 = vmatprep.subr.mxu0 0.0
    %170 = vmatpush1.msra.mxu0 0.0
    %171 = vmatprep.subr.mxu0 0.0
    %172 = vmatpush1.msra.mxu0 0.0
    %173 = vmatprep.subr.mxu0 0.0
    %174 = vmatpush1.msra.mxu0 0.0
    %175 = vmatprep.subr.mxu0 0.0
    %176 = vmatpush1.msra.mxu0 0.0
    %177 = vmatprep.subr.mxu0 0.0
    %178 = vmatpush1.msra.mxu0 0.0
    %179 = vmatprep.subr.mxu0 0.0
    %180 = vmatpush1.msra.mxu0 0.0
    %181 = vmatprep.subr.mxu0 0.0
    %182 = vmatpush1.msra.mxu0 0.0
    %183 = vmatprep.subr.mxu0 0.0
    %184 = vmatpush1.msra.mxu0 0.0
    %185 = vmatprep.subr.mxu0 0.0
    %186 = vmatpush1.msra.mxu0 0.0
    %187 = vmatprep.subr.mxu0 0.0
    %188 = vmatpush1.msra.mxu0 0.0
    %189 = vmatprep.subr.mxu0 0.0
    %190 = vmatpush1.msra.mxu0 0.0
    %191 = vmatprep.subr.mxu0 0.0
    %192 = vmatpush1.msra.mxu0 0.0
    %193 = vmatprep.subr.mxu0 0.0
    %194 = vmatpush1.msra.mxu0 0.0
    %195 = vmatprep.subr.mxu0 0.0
    %196 = vmatpush1.msra.mxu0 0.0
    %197 = vmatprep.subr.mxu0 0.0
    %198 = vmatpush1.msra.mxu0 0.0
    %199 = vmatprep.subr.mxu0 0.0
    %200 = vmatpush1.msra.mxu0 0.0
    %201 = vmatprep.subr.mxu0 0.0
    %202 = vmatpush1.msra.mxu0 0.0
    %203 = vmatprep.subr.mxu0 0.0
    %204 = vmatpush1.msra.mxu0 0.0
    %205 = vmatprep.subr.mxu0 0.0
    %206 = vmatpush1.msra.mxu0 0.0
    %207 = vmatprep.subr.mxu0 0.0
    %208 = vmatpush1.msra.mxu0 0.0
    %209 = vmatprep.subr.mxu0 0.0
    %210 = vmatpush1.msra.mxu0 0.0
    %211 = vmatprep.subr.mxu0 0.0
    %212 = vmatpush1.msra.mxu0 0.0
    %213 = vmatprep.subr.mxu0 0.0
    %214 = vmatpush1.msra.mxu0 0.0
    %215 = vmatprep.subr.mxu0 0.0
    %216 = vmatpush1.msra.mxu0 0.0
    %217 = vmatprep.subr.mxu0 0.0
    %218 = vmatpush1.msra.mxu0 0.0
    %219 = vmatprep.subr.mxu0 0.0
    %220 = vmatpush1.msra.mxu0 0.0
    %221 = vmatprep.subr.mxu0 0.0
    %222 = vmatpush1.msra.mxu0 0.0
    %223 = vmatprep.subr.mxu0 0.0
    %224 = vmatpush1.msra.mxu0 0.0
    %225 = vmatprep.subr.mxu0 0.0
    %226 = vmatpush1.msra.mxu0 0.0
    %227 = vmatprep.subr.mxu0 0.0
    %228 = vmatpush1.msra.mxu0 0.0
    %229 = vmatprep.mubr.f32.mxu0 0.0
    %230 = vmatmul.mubr.f32.gmra.mrb[0].mxu0 %v67
    %v231 = vpop.f32.mrb[0].mxu0
    %v232 = vadd.f32 0.0, %v231
    %v233 = vpop.f32.mrb[0].mxu0
    %234 = vmatprep.mubr.f32.mxu0 0.0
    %235 = vmatmul.mubr.f32.gmra.mrb[0].mxu0 %v70
    %v236 = vpop.f32.mrb[0].mxu0
    %v237 = vadd.f32 0.0, %v236
    %v238 = vpop.f32.mrb[0].mxu0
    %239 = vmatprep.mubr.f32.mxu0 0.0
    %240 = vmatmul.mubr.f32.gmra.mrb[0].mxu0 %v73
    %v241 = vpop.f32.mrb[0].mxu0
    %v242 = vadd.f32 0.0, %v241
    %v243 = vpop.f32.mrb[0].mxu0
    %244 = vdwg.mxu0
    %v245 = vadd.f32 %v162, %v232
    %v246 = vadd.f32 %v163, %v237
    %v247 = vadd.f32 %v164, %v242
    %248 = vst.msk [vmem:[#allocation3] sm:$0xff] %vm158, %v245
    %249 = vst.msk [vmem:[#allocation3 + $0x8] sm:$0xff] %vm158, %v246
    %250 = vst.msk [vmem:[#allocation3 + $0x10] sm:$0xff] %vm158, %v247
    // Predicated region
    $region38: #{tpu_custom_call.1} parent=1 // pred_check
      %p251 = pneg %p29
    $region39: #{tpu_custom_call.1} parent=1 // pred_check_branch
      %253 = sbr.rel (%p251) target = $region41
    $region40: #{tpu_custom_call.1} parent=1 // pred_region
      %v254 = vld [vmem:[#allocation4] sm:$0xff]
      %v255 = vld [vmem:[#allocation4 + $0x8] sm:$0xff]
      %v256 = vld [vmem:[#allocation4 + $0x10] sm:$0xff]
      %v257 = vld [vmem:[#allocation4 + $0x18] sm:$0xff]
      %v258 = vld [vmem:[%s2] sm:$0xff]
      %v259 = vld [vmem:[%s2 + $0x8] sm:$0xff]
      %v260 = vld [vmem:[%s2 + $0x10] sm:$0xff]
      %v261 = vld [vmem:[%s2 + $0x18] sm:$0xff]
      %s262 = scalar_lea.vmem %s2, 32
      %v263 = vld [vmem:[%s262] sm:$0xff]
      %v264 = vld [vmem:[%s262 + $0x8] sm:$0xff]
      %v265 = vld [vmem:[%s262 + $0x10] sm:$0xff]
      %v266 = vld [vmem:[%s262 + $0x18] sm:$0xff]
      %v268 = vsel %vm65, %v263, 0
      %v271 = vsel %vm65, %v264, 0
      %v274 = vsel %vm65, %v265, 0
      %v277 = vsel %vm65, %v266, 0
      %279 = vmatprep.subr.mxu0 0.0
      %280 = vmatpush1.msra.mxu0 %v57
      %281 = vmatprep.subr.mxu0 0.0
      %282 = vmatpush1.msra.mxu0 %v58
      %283 = vmatprep.subr.mxu0 0.0
      %284 = vmatpush1.msra.mxu0 0.0
      %285 = vmatprep.subr.mxu0 0.0
      %286 = vmatpush1.msra.mxu0 0.0
      %287 = vmatprep.subr.mxu0 0.0
      %288 = vmatpush1.msra.mxu0 0.0
      %289 = vmatprep.subr.mxu0 0.0
      %290 = vmatpush1.msra.mxu0 0.0
      %291 = vmatprep.subr.mxu0 0.0
      %292 = vmatpush1.msra.mxu0 0.0
      %293 = vmatprep.subr.mxu0 0.0
      %294 = vmatpush1.msra.mxu0 0.0
      %295 = vmatprep.subr.mxu0 0.0
      %296 = vmatpush1.msra.mxu0 0.0
      %297 = vmatprep.subr.mxu0 0.0
      %298 = vmatpush1.msra.mxu0 0.0
      %299 = vmatprep.subr.mxu0 0.0
      %300 = vmatpush1.msra.mxu0 0.0
      %301 = vmatprep.subr.mxu0 0.0
      %302 = vmatpush1.msra.mxu0 0.0
      %303 = vmatprep.subr.mxu0 0.0
      %304 = vmatpush1.msra.mxu0 0.0
      %305 = vmatprep.subr.mxu0 0.0
      %306 = vmatpush1.msra.mxu0 0.0
      %307 = vmatprep.subr.mxu0 0.0
      %308 = vmatpush1.msra.mxu0 0.0
      %309 = vmatprep.subr.mxu0 0.0
      %310 = vmatpush1.msra.mxu0 0.0
      %311 = vmatprep.subr.mxu0 0.0
      %312 = vmatpush1.msra.mxu0 0.0
      %313 = vmatprep.subr.mxu0 0.0
      %314 = vmatpush1.msra.mxu0 0.0
      %315 = vmatprep.subr.mxu0 0.0
      %316 = vmatpush1.msra.mxu0 0.0
      %317 = vmatprep.subr.mxu0 0.0
      %318 = vmatpush1.msra.mxu0 0.0
      %319 = vmatprep.subr.mxu0 0.0
      %320 = vmatpush1.msra.mxu0 0.0
      %321 = vmatprep.subr.mxu0 0.0
      %322 = vmatpush1.msra.mxu0 0.0
      %323 = vmatprep.subr.mxu0 0.0
      %324 = vmatpush1.msra.mxu0 0.0
      %325 = vmatprep.subr.mxu0 0.0
      %326 = vmatpush1.msra.mxu0 0.0
      %327 = vmatprep.subr.mxu0 0.0
      %328 = vmatpush1.msra.mxu0 0.0
      %329 = vmatprep.subr.mxu0 0.0
      %330 = vmatpush1.msra.mxu0 0.0
      %331 = vmatprep.subr.mxu0 0.0
      %332 = vmatpush1.msra.mxu0 0.0
      %333 = vmatprep.subr.mxu0 0.0
      %334 = vmatpush1.msra.mxu0 0.0
      %335 = vmatprep.subr.mxu0 0.0
      %336 = vmatpush1.msra.mxu0 0.0
      %337 = vmatprep.subr.mxu0 0.0
      %338 = vmatpush1.msra.mxu0 0.0
      %339 = vmatprep.subr.mxu0 0.0
      %340 = vmatpush1.msra.mxu0 0.0
      %341 = vmatprep.subr.mxu0 0.0
      %342 = vmatpush1.msra.mxu0 0.0
      %343 = vmatprep.mubr.f32.mxu0 0.0
      %344 = vmatmul.mubr.f32.gmra.mrb[0].mxu0 %v268
      %v345 = vpop.f32.mrb[0].mxu0
      %v346 = vadd.f32 0.0, %v345
      %v347 = vpop.f32.mrb[0].mxu0
      %348 = vmatprep.mubr.f32.mxu0 0.0
      %349 = vmatmul.mubr.f32.gmra.mrb[0].mxu0 %v271
      %v350 = vpop.f32.mrb[0].mxu0
      %v351 = vadd.f32 0.0, %v350
      %v352 = vpop.f32.mrb[0].mxu0
      %353 = vmatprep.mubr.f32.mxu0 0.0
      %354 = vmatmul.mubr.f32.gmra.mrb[0].mxu0 %v274
      %v355 = vpop.f32.mrb[0].mxu0
      %v356 = vadd.f32 0.0, %v355
      %v357 = vpop.f32.mrb[0].mxu0
      %358 = vmatprep.mubr.f32.mxu0 0.0
      %359 = vmatmul.mubr.f32.gmra.mrb[0].mxu0 %v277
      %v360 = vpop.f32.mrb[0].mxu0
      %v361 = vadd.f32 0.0, %v360
      %v362 = vpop.f32.mrb[0].mxu0
      %363 = vdwg.mxu0
      %v365 = vsel %vm65, %v258, 0
      %v368 = vsel %vm65, %v259, 0
      %v371 = vsel %vm65, %v260, 0
      %v374 = vsel %vm65, %v261, 0
      %376 = vmatprep.subr.mxu0 0.0
      %377 = vmatpush1.msra.mxu0 %v54
      %378 = vmatprep.subr.mxu0 0.0
      %379 = vmatpush1.msra.mxu0 %v55
      %380 = vmatprep.subr.mxu0 0.0
      %381 = vmatpush1.msra.mxu0 0.0
      %382 = vmatprep.subr.mxu0 0.0
      %383 = vmatpush1.msra.mxu0 0.0
      %384 = vmatprep.subr.mxu0 0.0
      %385 = vmatpush1.msra.mxu0 0.0
      %386 = vmatprep.subr.mxu0 0.0
      %387 = vmatpush1.msra.mxu0 0.0
      %388 = vmatprep.subr.mxu0 0.0
      %389 = vmatpush1.msra.mxu0 0.0
      %390 = vmatprep.subr.mxu0 0.0
      %391 = vmatpush1.msra.mxu0 0.0
      %392 = vmatprep.subr.mxu0 0.0
      %393 = vmatpush1.msra.mxu0 0.0
      %394 = vmatprep.subr.mxu0 0.0
      %395 = vmatpush1.msra.mxu0 0.0
      %396 = vmatprep.subr.mxu0 0.0
      %397 = vmatpush1.msra.mxu0 0.0
      %398 = vmatprep.subr.mxu0 0.0
      %399 = vmatpush1.msra.mxu0 0.0
      %400 = vmatprep.subr.mxu0 0.0
      %401 = vmatpush1.msra.mxu0 0.0
      %402 = vmatprep.subr.mxu0 0.0
      %403 = vmatpush1.msra.mxu0 0.0
      %404 = vmatprep.subr.mxu0 0.0
      %405 = vmatpush1.msra.mxu0 0.0
      %406 = vmatprep.subr.mxu0 0.0
      %407 = vmatpush1.msra.mxu0 0.0
      %408 = vmatprep.subr.mxu0 0.0
      %409 = vmatpush1.msra.mxu0 0.0
      %410 = vmatprep.subr.mxu0 0.0
      %411 = vmatpush1.msra.mxu0 0.0
      %412 = vmatprep.subr.mxu0 0.0
      %413 = vmatpush1.msra.mxu0 0.0
      %414 = vmatprep.subr.mxu0 0.0
      %415 = vmatpush1.msra.mxu0 0.0
      %416 = vmatprep.subr.mxu0 0.0
      %417 = vmatpush1.msra.mxu0 0.0
      %418 = vmatprep.subr.mxu0 0.0
      %419 = vmatpush1.msra.mxu0 0.0
      %420 = vmatprep.subr.mxu0 0.0
      %421 = vmatpush1.msra.mxu0 0.0
      %422 = vmatprep.subr.mxu0 0.0
      %423 = vmatpush1.msra.mxu0 0.0
      %424 = vmatprep.subr.mxu0 0.0
      %425 = vmatpush1.msra.mxu0 0.0
      %426 = vmatprep.subr.mxu0 0.0
      %427 = vmatpush1.msra.mxu0 0.0
      %428 = vmatprep.subr.mxu0 0.0
      %429 = vmatpush1.msra.mxu0 0.0
      %430 = vmatprep.subr.mxu0 0.0
      %431 = vmatpush1.msra.mxu0 0.0
      %432 = vmatprep.subr.mxu0 0.0
      %433 = vmatpush1.msra.mxu0 0.0
      %434 = vmatprep.subr.mxu0 0.0
      %435 = vmatpush1.msra.mxu0 0.0
      %436 = vmatprep.subr.mxu0 0.0
      %437 = vmatpush1.msra.mxu0 0.0
      %438 = vmatprep.subr.mxu0 0.0
      %439 = vmatpush1.msra.mxu0 0.0
      %440 = vmatprep.mubr.f32.mxu0 0.0
      %441 = vmatmul.mubr.f32.gmra.mrb[0].mxu0 %v365
      %v442 = vpop.f32.mrb[0].mxu0
      %v443 = vadd.f32 %v346, %v442
      %v444 = vpop.f32.mrb[0].mxu0
      %445 = vmatprep.mubr.f32.mxu0 0.0
      %446 = vmatmul.mubr.f32.gmra.mrb[0].mxu0 %v368
      %v447 = vpop.f32.mrb[0].mxu0
      %v448 = vadd.f32 %v351, %v447
      %v449 = vpop.f32.mrb[0].mxu0
      %450 = vmatprep.mubr.f32.mxu0 0.0
      %451 = vmatmul.mubr.f32.gmra.mrb[0].mxu0 %v371
      %v452 = vpop.f32.mrb[0].mxu0
      %v453 = vadd.f32 %v356, %v452
      %v454 = vpop.f32.mrb[0].mxu0
      %455 = vmatprep.mubr.f32.mxu0 0.0
      %456 = vmatmul.mubr.f32.gmra.mrb[0].mxu0 %v374
      %v457 = vpop.f32.mrb[0].mxu0
      %v458 = vadd.f32 %v361, %v457
      %v459 = vpop.f32.mrb[0].mxu0
      %460 = vdwg.mxu0
      %v461 = vadd.f32 %v254, %v443
      %v462 = vadd.f32 %v255, %v448
      %v463 = vadd.f32 %v256, %v453
      %v464 = vadd.f32 %v257, %v458
      %465 = vst.msk [vmem:[#allocation4] sm:$0xff] %vm158, %v461
      %466 = vst.msk [vmem:[#allocation4 + $0x8] sm:$0xff] %vm158, %v462
      %467 = vst.msk [vmem:[#allocation4 + $0x10] sm:$0xff] %vm158, %v463
      %468 = vst.msk [vmem:[#allocation4 + $0x18] sm:$0xff] %vm158, %v464
    $region41: #{tpu_custom_call.1} parent=1 // pred_fallthru
      _
    // Predicated region
    $region42: #{tpu_custom_call.1} parent=1 // pred_check
      %p469 = pneg %p30
    $region43: #{tpu_custom_call.1} parent=1 // pred_check_branch
      %471 = sbr.rel (%p469) target = $region45
    $region44: #{tpu_custom_call.1} parent=1 // pred_region
      %v472 = vld [vmem:[#allocation2] sm:$0xff]
      %v473 = vld [vmem:[#allocation2 + $0x8] sm:$0xff]
      %v474 = vld [vmem:[#allocation2 + $0x10] sm:$0xff]
      %v475 = vld [vmem:[#allocation3] sm:$0xff]
      %v476 = vld [vmem:[#allocation3 + $0x8] sm:$0xff]
      %v477 = vld [vmem:[#allocation3 + $0x10] sm:$0xff]
      %v478 = vld [vmem:[#allocation5] sm:$0x1]
      %v479 = vmul.f32 %v472, %v475
      %v480 = vmul.f32 %v473, %v476
      %v481 = vmul.f32 %v474, %v477
      %v482 = vsel %vm158, %v479, 0.0
      %v483 = vsel %vm158, %v480, 0.0
      %v484 = vadd.f32 %v482, %v483
      %v485 = vsel %vm158, %v481, 0.0
      %v486 = vadd.f32 %v484, %v485
      %v487 = vrot.slane %v486, 4
      %v488 = vadd.f32 %v486, %v487
      %v489 = vrot.slane %v488, 2
      %v490 = vadd.f32 %v488, %v489
      %v491 = vrot.slane %v490, 1
      %v492 = vadd.f32 %v490, %v491
      %v493 = vadd.f32 %v478, %v492
      %vm494 = vcmask 57344
      %495 = vst.msk [vmem:[#allocation5] sm:$0x1] %vm494, %v493
      %v496 = vld [vmem:[#allocation6] sm:$0x1]
      %v497 = vmul.f32 %v472, %v472
      %v498 = vmul.f32 %v473, %v473
      %v499 = vmul.f32 %v474, %v474
      %v500 = vsel %vm158, %v497, 0.0
      %v501 = vsel %vm158, %v498, 0.0
      %v502 = vadd.f32 %v500, %v501
      %v503 = vsel %vm158, %v499, 0.0
      %v504 = vadd.f32 %v502, %v503
      %v505 = vrot.slane %v504, 4
      %v506 = vadd.f32 %v504, %v505
      %v507 = vrot.slane %v506, 2
      %v508 = vadd.f32 %v506, %v507
      %v509 = vrot.slane %v508, 1
      %v510 = vadd.f32 %v508, %v509
      %v511 = vadd.f32 %v496, %v510
      %512 = vst.msk [vmem:[#allocation6] sm:$0x1] %vm494, %v511
      %v513 = vld [vmem:[#allocation7] sm:$0x1]
      %v514 = vmul.f32 %v475, %v475
      %v515 = vmul.f32 %v476, %v476
      %v516 = vmul.f32 %v477, %v477
      %v517 = vsel %vm158, %v514, 0.0
      %v518 = vsel %vm158, %v515, 0.0
      %v519 = vadd.f32 %v517, %v518
      %v520 = vsel %vm158, %v516, 0.0
      %v521 = vadd.f32 %v519, %v520
      %v522 = vrot.slane %v521, 4
      %v523 = vadd.f32 %v521, %v522
      %v524 = vrot.slane %v523, 2
      %v525 = vadd.f32 %v523, %v524
      %v526 = vrot.slane %v525, 1
      %v527 = vadd.f32 %v525, %v526
      %v528 = vadd.f32 %v513, %v527
      %529 = vst.msk [vmem:[#allocation7] sm:$0x1] %vm494, %v528
      // Predicated region
      $region46: #{tpu_custom_call.1} parent=44 // pred_check
        %p530 = pneg %p29
      $region47: #{tpu_custom_call.1} parent=44 // pred_check_branch
        %532 = sbr.rel (%p530) target = $region49
      $region48: #{tpu_custom_call.1} parent=44 // pred_region
        %v533 = vld [vmem:[#allocation4] sm:$0xff]
        %v534 = vld [vmem:[#allocation4 + $0x8] sm:$0xff]
        %v535 = vld [vmem:[#allocation4 + $0x10] sm:$0xff]
        %v536 = vld [vmem:[#allocation4 + $0x18] sm:$0xff]
        %v537 = vld [vmem:[%s3] sm:$0xff]
        %v538 = vld [vmem:[%s3 + $0x8] sm:$0xff]
        %v539 = vld [vmem:[%s3 + $0x10] sm:$0xff]
        %v540 = vld [vmem:[%s3 + $0x18] sm:$0xff]
        %542 = vset.pattern.permute.xlu0 0
        %543 = vperm.xlu0 %542, %v537
        %v544 = vpop.permute.xlu0 %543
        %547 = vset.pattern.permute.xlu0 0
        %548 = vperm.xlu0 %547, %v538
        %v549 = vpop.permute.xlu0 %548
        %552 = vset.pattern.permute.xlu0 0
        %553 = vperm.xlu0 %552, %v539
        %v554 = vpop.permute.xlu0 %553
        %557 = vset.pattern.permute.xlu0 0
        %558 = vperm.xlu0 %557, %v540
        %v559 = vpop.permute.xlu0 %558
        %v561 = vadd.f32 %v533, %v544
        %v562 = vadd.f32 %v534, %v549
        %v563 = vadd.f32 %v535, %v554
        %v564 = vadd.f32 %v536, %v559
        %v565 = vmax.f32 %v561, 0.0
        %v566 = vmax.f32 %v562, 0.0
        %v567 = vmax.f32 %v563, 0.0
        %v568 = vmax.f32 %v564, 0.0
        %v569 = vld [vmem:[%s4] sm:$0xff]
        %v570 = vld [vmem:[%s4 + $0x8] sm:$0xff]
        %v571 = vld [vmem:[%s4 + $0x10] sm:$0xff]
        %v572 = vld [vmem:[%s4 + $0x18] sm:$0xff]
        %574 = vset.pattern.permute.xlu0 0
        %575 = vperm.xlu0 %574, %v569
        %v576 = vpop.permute.xlu0 %575
        %579 = vset.pattern.permute.xlu0 0
        %580 = vperm.xlu0 %579, %v570
        %v581 = vpop.permute.xlu0 %580
        %584 = vset.pattern.permute.xlu0 0
        %585 = vperm.xlu0 %584, %v571
        %v586 = vpop.permute.xlu0 %585
        %589 = vset.pattern.permute.xlu0 0
        %590 = vperm.xlu0 %589, %v572
        %v591 = vpop.permute.xlu0 %590
        %v593 = vmul.f32 %v565, %v576
        %v594 = vmul.f32 %v566, %v581
        %v595 = vmul.f32 %v567, %v586
        %v596 = vmul.f32 %v568, %v591
        %v597 = vsel %vm158, %v593, 0.0
        %v598 = vsel %vm158, %v594, 0.0
        %v599 = vadd.f32 %v597, %v598
        %v600 = vsel %vm158, %v595, 0.0
        %v601 = vadd.f32 %v599, %v600
        %v602 = vsel %vm158, %v596, 0.0
        %v603 = vadd.f32 %v601, %v602
        %v604 = vrot.slane %v603, 4
        %v605 = vadd.f32 %v603, %v604
        %v606 = vrot.slane %v605, 2
        %v607 = vadd.f32 %v605, %v606
        %v608 = vrot.slane %v607, 1
        %v609 = vadd.f32 %v607, %v608
        %v610 = vld [vmem:[#allocation6] sm:$0x1]
        %v611 = vld [vmem:[#allocation7] sm:$0x1]
        %v612 = vmul.f32 %v610, %v611
        %v613 = vrsqrt.pop %v612
        %v614 = vmul.f32 %v612, %v613
        %vm615 = vcmp.eq.f32.partialorder %v612, inf
        %v616 = vsel %vm615, %v612, %v614
        %vm617 = vcmp.eq.f32.partialorder %v612, 0.0
        %v618 = vand.u32 %v612, 2147483648
        %v619 = vsel %vm617, %v618, %v616
        %v620 = vadd.f32 %v619, 1e-08
        %v621 = vld [vmem:[#allocation5] sm:$0x1]
        %v622 = vrcp.pop %v620
        %v623 = vmul.f32 %v621, %v622
        %s624 = sld [smem:[#allocation8]]
        %v625 = vstv %s624
        %v626 = vmul.f32 %v623, %v625
        %v627 = vadd.f32 %v609, %v626
        %s628 = sld [smem:[#allocation9]]
        %v629 = vstv %s628
        %v630 = vadd.f32 %v627, %v629
        %631 = vst.msk [vmem:[#allocation10] sm:$0x1] %vm494, %v630
      $region49: #{tpu_custom_call.1} parent=44 // pred_fallthru
        _
    $region45: #{tpu_custom_call.1} parent=1 // pred_fallthru
      _
    // Predicated region
    $region50: #{tpu_custom_call.1} parent=1 // pred_check
      _
    $region51: #{tpu_custom_call.1} parent=1 // pred_check_branch
      %633 = sbr.rel (0) target = $region53
    $region52: #{tpu_custom_call.1} parent=1 // pred_region
      %s635 = ssub.s32 16, 16
      %636 = vsyncadd [#allocation11], %s635
      %s638 = sshll.u32 [#allocation10], 4
      %s639 = int_to_ptr.vmem [resolvable:$true] %s638
      %641 = dma.vmem_to_hbm [thread:$0]  %s639, 16, %s7, [#allocation11]
    $region53: #{tpu_custom_call.1} parent=1 // pred_fallthru
      _
    // Predicated region
    $region54: #{tpu_custom_call.1} parent=1 // pred_check
      _
    $region55: #{tpu_custom_call.1} parent=1 // pred_check_branch
      %643 = sbr.rel (0) target = $region57
    $region56: #{tpu_custom_call.1} parent=1 // pred_region
      %644 = dma.done [#allocation11], 16
    $region57: #{tpu_custom_call.1} parent=1 // pred_fallthru
      _
    %645 = vsyncpa [#allocation11], 1

</llo_original>
